<compile_context>
chip_gen: v5e
topology: v5e:2x2
jax: 0.10.0
libtpu: 0.0.40
codegen_flags: <defaults>
</compile_context>

<pallas_src>
import functools
import math

import jax
import jax.numpy as jnp
import numpy as np
from jax import lax
from jax.experimental import pallas as pl
from jax.experimental.pallas import tpu as pltpu


# ---------------------------------------------------------------------------
# Fused kernel
# ---------------------------------------------------------------------------

def _fused_attention_kernel(x_ref, wqkv_ref, wproj_ref, bproj_ref, o_ref,
                            qkv_sc, ctx_sc, *, num_heads, scale):
    """One batch element per grid step; all intermediates stay in VMEM.

    x_ref:     (1, N, C)   input block
    wqkv_ref:  (3C, C)     qkv weight (torch nn.Linear layout: (out, in))
    wproj_ref: (C, C)      proj weight
    bproj_ref: (1, C)      proj bias
    o_ref:     (1, N, C)   output block (lane-dense, heads already merged)
    qkv_sc:    (N, 3C) f32 VMEM scratch for the qkv projection
    ctx_sc:    (N, C)  f32 VMEM scratch for the head-merged attention output
    """
    x = x_ref[0]                                       # (N, C)
    C = x.shape[-1]
    D = C // num_heads

    # qkv = x @ w_qkv.T  -- contract the input-channel dim of both operands,
    # so no host-side weight transpose (full HBM copy) is needed.
    qkv_sc[...] = lax.dot_general(
        x, wqkv_ref[...], (((1,), (1,)), ((), ())),
        preferred_element_type=jnp.float32)            # (N, 3C)

    # Per-head scaled-dot-product attention.  Static unroll over heads keeps a
    # single grid step per batch element (no per-(b, h) launch overhead) and
    # the head merge happens in VMEM via lane-offset stores.
    for h in range(num_heads):
        q = qkv_sc[:, h * D:(h + 1) * D]               # (N, D)
        k = qkv_sc[:, C + h * D:C + (h + 1) * D]       # (N, D)
        v = qkv_sc[:, 2 * C + h * D:2 * C + (h + 1) * D]

        s = lax.dot_general(                           # (N, N) = q @ k.T
            q, k, (((1,), (1,)), ((), ())),
            preferred_element_type=jnp.float32) * scale
        m = jnp.max(s, axis=-1, keepdims=True)
        p = jnp.exp(s - m)
        p = p * pl.reciprocal(jnp.sum(p, axis=-1, keepdims=True), approx=True)
        # TODO(synk): attention dropout omitted (inference / eval mode).
        ctx_sc[:, h * D:(h + 1) * D] = jnp.dot(
            p, v, preferred_element_type=jnp.float32)  # (N, D)

    # Output projection: (N, C) @ w_proj.T + b  -> lane-dense (N, C) store.
    out = lax.dot_general(
        ctx_sc[...], wproj_ref[...], (((1,), (1,)), ((), ())),
        preferred_element_type=jnp.float32) + bproj_ref[...]
    # TODO(synk): projection dropout omitted (inference / eval mode).
    o_ref[0] = out.astype(o_ref.dtype)


# ---------------------------------------------------------------------------
# Wrapper
# ---------------------------------------------------------------------------

def attention_forward(x, params, num_heads):
    """Fused forward of the timm Attention module (eval mode)."""
    B, N, C = x.shape
    D = C // num_heads
    scale = D ** (-0.5)

    w_qkv = params["w_qkv"]                 # (3C, C), torch Linear layout
    w_proj = params["w_proj"]               # (C, C)
    b_proj = params["b_proj"].reshape(1, C)

    kernel = functools.partial(
        _fused_attention_kernel, num_heads=num_heads, scale=scale)

    return pl.pallas_call(
        kernel,
        out_shape=jax.ShapeDtypeStruct((B, N, C), x.dtype),
        grid=(B,),
        in_specs=[
            pl.BlockSpec((1, N, C), lambda b: (b, 0, 0)),      # x block
            pl.BlockSpec((3 * C, C), lambda b: (0, 0)),        # w_qkv (resident)
            pl.BlockSpec((C, C), lambda b: (0, 0)),            # w_proj (resident)
            pl.BlockSpec((1, C), lambda b: (0, 0)),            # b_proj
        ],
        out_specs=pl.BlockSpec((1, N, C), lambda b: (b, 0, 0)),
        scratch_shapes=[
            pltpu.VMEM((N, 3 * C), jnp.float32),               # qkv scratch
            pltpu.VMEM((N, C), jnp.float32),                   # merged context
        ],
        compiler_params=pltpu.CompilerParams(
            dimension_semantics=("parallel",),                 # megacore on v7x
        ),
    )(x, w_qkv, w_proj, b_proj)


# ---------------------------------------------------------------------------
# Pure-JAX reference (mirrors the PyTorch forward in eval mode)
# ---------------------------------------------------------------------------

def attention_reference(x, params, num_heads):
    B, N, C = x.shape
    H = num_heads
    D = C // H
    scale = D ** (-0.5)
    qkv = x @ params["w_qkv"].T
    qkv = qkv.reshape(B, N, 3, H, D).transpose(2, 0, 3, 1, 4)
    q, k, v = qkv[0], qkv[1], qkv[2]
    attn = jnp.einsum("bhnd,bhmd->bhnm", q, k) * scale
    attn = jax.nn.softmax(attn, axis=-1)
    o = jnp.einsum("bhnm,bhmd->bhnd", attn, v)
    o = o.transpose(0, 2, 1, 3).reshape(B, N, C)
    return o @ params["w_proj"].T + params["b_proj"]


# ---------------------------------------------------------------------------
# Main
# ---------------------------------------------------------------------------

if __name__ == "__main__":
    # Small shapes implied by the forward: x is (B, N, C).
    B, N, C = 2, 8, 32
    num_heads = 8                      # module default; head_dim = 4

    key = jax.random.PRNGKey(0)
    k_x, k_qkv, k_proj, k_bias = jax.random.split(key, 4)

    x = jax.random.normal(k_x, (B, N, C), dtype=jnp.float32)

    # Deterministic parameter init (kaiming-uniform-ish bounds, like nn.Linear).
    bound = 1.0 / math.sqrt(C)
    params = {
        "w_qkv": jax.random.uniform(k_qkv, (3 * C, C), jnp.float32, -bound, bound),
        "w_proj": jax.random.uniform(k_proj, (C, C), jnp.float32, -bound, bound),
        "b_proj": jax.random.uniform(k_bias, (C,), jnp.float32, -bound, bound),
    }

    out = attention_forward(x, params, num_heads)
    out = jax.block_until_ready(out)

    ref = attention_reference(x, params, num_heads)
    assert out.shape == (B, N, C)
    # Tolerance accounts for the approximate (EUP) reciprocal in the softmax
    # normalization; any structural error would be orders of magnitude larger.
    np.testing.assert_allclose(np.asarray(out), np.asarray(ref),
                               atol=1e-3, rtol=1e-3)

    print("KERNEL_OK")
</pallas_src>

<mosaic_0001>
module attributes {stable_mosaic.version = 11 : i64} {
  func.func @_fused_attention_kernel(%arg0: i32, %arg1: memref<1x8x32xf32, #tpu.memory_space<vmem>>, %arg2: memref<96x32xf32, #tpu.memory_space<vmem>>, %arg3: memref<32x32xf32, #tpu.memory_space<vmem>>, %arg4: memref<1x32xf32, #tpu.memory_space<vmem>>, %arg5: memref<1x8x32xf32, #tpu.memory_space<vmem>>, %arg6: memref<8x96xf32, #tpu.memory_space<vmem>>, %arg7: memref<8x32xf32, #tpu.memory_space<vmem>>) attributes {dimension_semantics = [#tpu.dimension_semantics<parallel>], iteration_bounds = array<i64: 2>, scalar_prefetch = 0 : i64, scratch_operands = 2 : i64, tpu.core_type = #tpu.core_type<tc>, window_params = [{transform_indices = @transform_0, window_bounds = array<i64: 1, 8, 32>}, {pipeline_mode = #tpu.pipeline_mode<synchronous>, transform_indices = @transform_1, window_bounds = array<i64: 96, 32>}, {pipeline_mode = #tpu.pipeline_mode<synchronous>, transform_indices = @transform_2, window_bounds = array<i64: 32, 32>}, {pipeline_mode = #tpu.pipeline_mode<synchronous>, transform_indices = @transform_3, window_bounds = array<i64: 1, 32>}, {transform_indices = @transform_4, window_bounds = array<i64: 1, 8, 32>}]} {
    %c0 = arith.constant 0 : index
    %c0_0 = arith.constant 0 : index
    %c0_1 = arith.constant 0 : index
    %0 = vector.load %arg1[%c0, %c0_0, %c0_1] : memref<1x8x32xf32, #tpu.memory_space<vmem>>, vector<1x8x32xf32>
    %1 = vector.shape_cast %0 : vector<1x8x32xf32> to vector<8x32xf32>
    %c0_2 = arith.constant 0 : index
    %c0_3 = arith.constant 0 : index
    %2 = vector.load %arg2[%c0_2, %c0_3] : memref<96x32xf32, #tpu.memory_space<vmem>>, vector<96x32xf32>
    %cst = arith.constant dense<0.000000e+00> : vector<8x96xf32>
    %3 = tpu.matmul %1, %2, %cst {dimension_numbers = #tpu.dot_dimension_numbers<[1], [1], [0], [0], [0, 0, 1, 0], [], []>} : vector<8x32xf32>, vector<96x32xf32>, vector<8x96xf32> -> vector<8x96xf32>
    %c0_4 = arith.constant 0 : index
    %c0_5 = arith.constant 0 : index
    %4 = vector.load %arg6[%c0_4, %c0_5] : memref<8x96xf32, #tpu.memory_space<vmem>>, vector<8x96xf32>
    tpu.vector_store %arg6[%c0_4, %c0_5], %3 {strides = array<i32>} : memref<8x96xf32, #tpu.memory_space<vmem>>, vector<8x96xf32>,
    %c0_6 = arith.constant 0 : index
    %c0_7 = arith.constant 0 : index
    %5 = vector.load %arg6[%c0_6, %c0_7] : memref<8x96xf32, #tpu.memory_space<vmem>>, vector<8x4xf32>
    %c0_8 = arith.constant 0 : index
    %c32 = arith.constant 32 : index
    %6 = vector.load %arg6[%c0_8, %c32] : memref<8x96xf32, #tpu.memory_space<vmem>>, vector<8x4xf32>
    %c0_9 = arith.constant 0 : index
    %c64 = arith.constant 64 : index
    %7 = vector.load %arg6[%c0_9, %c64] : memref<8x96xf32, #tpu.memory_space<vmem>>, vector<8x4xf32>
    %cst_10 = arith.constant dense<0.000000e+00> : vector<8x8xf32>
    %8 = tpu.matmul %5, %6, %cst_10 {dimension_numbers = #tpu.dot_dimension_numbers<[1], [1], [0], [0], [0, 0, 1, 0], [], []>} : vector<8x4xf32>, vector<8x4xf32>, vector<8x8xf32> -> vector<8x8xf32>
    %cst_11 = arith.constant 5.000000e-01 : f32
    %9 = vector.broadcast %cst_11 : f32 to vector<8x8xf32>
    %10 = arith.mulf %8, %9 : vector<8x8xf32>
    %cst_12 = arith.constant dense<0xFF800000> : vector<8xf32>
    %11 = vector.multi_reduction <maximumf>, %10, %cst_12 [1] : vector<8x8xf32> to vector<8xf32>
    %12 = vector.shape_cast %11 : vector<8xf32> to vector<8x1xf32>
    %13 = vector.broadcast %12 : vector<8x1xf32> to vector<8x8xf32>
    %14 = arith.subf %10, %13 : vector<8x8xf32>
    %15 = math.exp %14 : vector<8x8xf32>
    %cst_13 = arith.constant dense<0.000000e+00> : vector<8xf32>
    %16 = vector.multi_reduction <add>, %15, %cst_13 [1] : vector<8x8xf32> to vector<8xf32>
    %17 = vector.shape_cast %16 : vector<8xf32> to vector<8x1xf32>
    %18 = tpu.reciprocal %17 {approx = true} : vector<8x1xf32> -> vector<8x1xf32>
    %19 = vector.broadcast %18 : vector<8x1xf32> to vector<8x8xf32>
    %20 = arith.mulf %15, %19 : vector<8x8xf32>
    %cst_14 = arith.constant dense<0.000000e+00> : vector<8x4xf32>
    %21 = tpu.matmul %20, %7, %cst_14 {dimension_numbers = #tpu.dot_dimension_numbers<[1], [0], [0], [1], [0, 0, 1, 1], [], []>} : vector<8x8xf32>, vector<8x4xf32>, vector<8x4xf32> -> vector<8x4xf32>
    %c0_15 = arith.constant 0 : index
    %c0_16 = arith.constant 0 : index
    %22 = vector.load %arg7[%c0_15, %c0_16] : memref<8x32xf32, #tpu.memory_space<vmem>>, vector<8x4xf32>
    tpu.vector_store %arg7[%c0_15, %c0_16], %21 {strides = array<i32>} : memref<8x32xf32, #tpu.memory_space<vmem>>, vector<8x4xf32>,
    %c0_17 = arith.constant 0 : index
    %c4 = arith.constant 4 : index
    %23 = vector.load %arg6[%c0_17, %c4] : memref<8x96xf32, #tpu.memory_space<vmem>>, vector<8x4xf32>
    %c0_18 = arith.constant 0 : index
    %c36 = arith.constant 36 : index
    %24 = vector.load %arg6[%c0_18, %c36] : memref<8x96xf32, #tpu.memory_space<vmem>>, vector<8x4xf32>
    %c0_19 = arith.constant 0 : index
    %c68 = arith.constant 68 : index
    %25 = vector.load %arg6[%c0_19, %c68] : memref<8x96xf32, #tpu.memory_space<vmem>>, vector<8x4xf32>
    %cst_20 = arith.constant dense<0.000000e+00> : vector<8x8xf32>
    %26 = tpu.matmul %23, %24, %cst_20 {dimension_numbers = #tpu.dot_dimension_numbers<[1], [1], [0], [0], [0, 0, 1, 0], [], []>} : vector<8x4xf32>, vector<8x4xf32>, vector<8x8xf32> -> vector<8x8xf32>
    %cst_21 = arith.constant 5.000000e-01 : f32
    %27 = vector.broadcast %cst_21 : f32 to vector<8x8xf32>
    %28 = arith.mulf %26, %27 : vector<8x8xf32>
    %cst_22 = arith.constant dense<0xFF800000> : vector<8xf32>
    %29 = vector.multi_reduction <maximumf>, %28, %cst_22 [1] : vector<8x8xf32> to vector<8xf32>
    %30 = vector.shape_cast %29 : vector<8xf32> to vector<8x1xf32>
    %31 = vector.broadcast %30 : vector<8x1xf32> to vector<8x8xf32>
    %32 = arith.subf %28, %31 : vector<8x8xf32>
    %33 = math.exp %32 : vector<8x8xf32>
    %cst_23 = arith.constant dense<0.000000e+00> : vector<8xf32>
    %34 = vector.multi_reduction <add>, %33, %cst_23 [1] : vector<8x8xf32> to vector<8xf32>
    %35 = vector.shape_cast %34 : vector<8xf32> to vector<8x1xf32>
    %36 = tpu.reciprocal %35 {approx = true} : vector<8x1xf32> -> vector<8x1xf32>
    %37 = vector.broadcast %36 : vector<8x1xf32> to vector<8x8xf32>
    %38 = arith.mulf %33, %37 : vector<8x8xf32>
    %cst_24 = arith.constant dense<0.000000e+00> : vector<8x4xf32>
    %39 = tpu.matmul %38, %25, %cst_24 {dimension_numbers = #tpu.dot_dimension_numbers<[1], [0], [0], [1], [0, 0, 1, 1], [], []>} : vector<8x8xf32>, vector<8x4xf32>, vector<8x4xf32> -> vector<8x4xf32>
    %c0_25 = arith.constant 0 : index
    %c4_26 = arith.constant 4 : index
    %40 = vector.load %arg7[%c0_25, %c4_26] : memref<8x32xf32, #tpu.memory_space<vmem>>, vector<8x4xf32>
    tpu.vector_store %arg7[%c0_25, %c4_26], %39 {strides = array<i32>} : memref<8x32xf32, #tpu.memory_space<vmem>>, vector<8x4xf32>,
    %c0_27 = arith.constant 0 : index
    %c8 = arith.constant 8 : index
    %41 = vector.load %arg6[%c0_27, %c8] : memref<8x96xf32, #tpu.memory_space<vmem>>, vector<8x4xf32>
    %c0_28 = arith.constant 0 : index
    %c40 = arith.constant 40 : index
    %42 = vector.load %arg6[%c0_28, %c40] : memref<8x96xf32, #tpu.memory_space<vmem>>, vector<8x4xf32>
    %c0_29 = arith.constant 0 : index
    %c72 = arith.constant 72 : index
    %43 = vector.load %arg6[%c0_29, %c72] : memref<8x96xf32, #tpu.memory_space<vmem>>, vector<8x4xf32>
    %cst_30 = arith.constant dense<0.000000e+00> : vector<8x8xf32>
    %44 = tpu.matmul %41, %42, %cst_30 {dimension_numbers = #tpu.dot_dimension_numbers<[1], [1], [0], [0], [0, 0, 1, 0], [], []>} : vector<8x4xf32>, vector<8x4xf32>, vector<8x8xf32> -> vector<8x8xf32>
    %cst_31 = arith.constant 5.000000e-01 : f32
    %45 = vector.broadcast %cst_31 : f32 to vector<8x8xf32>
    %46 = arith.mulf %44, %45 : vector<8x8xf32>
    %cst_32 = arith.constant dense<0xFF800000> : vector<8xf32>
    %47 = vector.multi_reduction <maximumf>, %46, %cst_32 [1] : vector<8x8xf32> to vector<8xf32>
    %48 = vector.shape_cast %47 : vector<8xf32> to vector<8x1xf32>
    %49 = vector.broadcast %48 : vector<8x1xf32> to vector<8x8xf32>
    %50 = arith.subf %46, %49 : vector<8x8xf32>
    %51 = math.exp %50 : vector<8x8xf32>
    %cst_33 = arith.constant dense<0.000000e+00> : vector<8xf32>
    %52 = vector.multi_reduction <add>, %51, %cst_33 [1] : vector<8x8xf32> to vector<8xf32>
    %53 = vector.shape_cast %52 : vector<8xf32> to vector<8x1xf32>
    %54 = tpu.reciprocal %53 {approx = true} : vector<8x1xf32> -> vector<8x1xf32>
    %55 = vector.broadcast %54 : vector<8x1xf32> to vector<8x8xf32>
    %56 = arith.mulf %51, %55 : vector<8x8xf32>
    %cst_34 = arith.constant dense<0.000000e+00> : vector<8x4xf32>
    %57 = tpu.matmul %56, %43, %cst_34 {dimension_numbers = #tpu.dot_dimension_numbers<[1], [0], [0], [1], [0, 0, 1, 1], [], []>} : vector<8x8xf32>, vector<8x4xf32>, vector<8x4xf32> -> vector<8x4xf32>
    %c0_35 = arith.constant 0 : index
    %c8_36 = arith.constant 8 : index
    %58 = vector.load %arg7[%c0_35, %c8_36] : memref<8x32xf32, #tpu.memory_space<vmem>>, vector<8x4xf32>
    tpu.vector_store %arg7[%c0_35, %c8_36], %57 {strides = array<i32>} : memref<8x32xf32, #tpu.memory_space<vmem>>, vector<8x4xf32>,
    %c0_37 = arith.constant 0 : index
    %c12 = arith.constant 12 : index
    %59 = vector.load %arg6[%c0_37, %c12] : memref<8x96xf32, #tpu.memory_space<vmem>>, vector<8x4xf32>
    %c0_38 = arith.constant 0 : index
    %c44 = arith.constant 44 : index
    %60 = vector.load %arg6[%c0_38, %c44] : memref<8x96xf32, #tpu.memory_space<vmem>>, vector<8x4xf32>
    %c0_39 = arith.constant 0 : index
    %c76 = arith.constant 76 : index
    %61 = vector.load %arg6[%c0_39, %c76] : memref<8x96xf32, #tpu.memory_space<vmem>>, vector<8x4xf32>
    %cst_40 = arith.constant dense<0.000000e+00> : vector<8x8xf32>
    %62 = tpu.matmul %59, %60, %cst_40 {dimension_numbers = #tpu.dot_dimension_numbers<[1], [1], [0], [0], [0, 0, 1, 0], [], []>} : vector<8x4xf32>, vector<8x4xf32>, vector<8x8xf32> -> vector<8x8xf32>
    %cst_41 = arith.constant 5.000000e-01 : f32
    %63 = vector.broadcast %cst_41 : f32 to vector<8x8xf32>
    %64 = arith.mulf %62, %63 : vector<8x8xf32>
    %cst_42 = arith.constant dense<0xFF800000> : vector<8xf32>
    %65 = vector.multi_reduction <maximumf>, %64, %cst_42 [1] : vector<8x8xf32> to vector<8xf32>
    %66 = vector.shape_cast %65 : vector<8xf32> to vector<8x1xf32>
    %67 = vector.broadcast %66 : vector<8x1xf32> to vector<8x8xf32>
    %68 = arith.subf %64, %67 : vector<8x8xf32>
    %69 = math.exp %68 : vector<8x8xf32>
    %cst_43 = arith.constant dense<0.000000e+00> : vector<8xf32>
    %70 = vector.multi_reduction <add>, %69, %cst_43 [1] : vector<8x8xf32> to vector<8xf32>
    %71 = vector.shape_cast %70 : vector<8xf32> to vector<8x1xf32>
    %72 = tpu.reciprocal %71 {approx = true} : vector<8x1xf32> -> vector<8x1xf32>
    %73 = vector.broadcast %72 : vector<8x1xf32> to vector<8x8xf32>
    %74 = arith.mulf %69, %73 : vector<8x8xf32>
    %cst_44 = arith.constant dense<0.000000e+00> : vector<8x4xf32>
    %75 = tpu.matmul %74, %61, %cst_44 {dimension_numbers = #tpu.dot_dimension_numbers<[1], [0], [0], [1], [0, 0, 1, 1], [], []>} : vector<8x8xf32>, vector<8x4xf32>, vector<8x4xf32> -> vector<8x4xf32>
    %c0_45 = arith.constant 0 : index
    %c12_46 = arith.constant 12 : index
    %76 = vector.load %arg7[%c0_45, %c12_46] : memref<8x32xf32, #tpu.memory_space<vmem>>, vector<8x4xf32>
    tpu.vector_store %arg7[%c0_45, %c12_46], %75 {strides = array<i32>} : memref<8x32xf32, #tpu.memory_space<vmem>>, vector<8x4xf32>,
    %c0_47 = arith.constant 0 : index
    %c16 = arith.constant 16 : index
    %77 = vector.load %arg6[%c0_47, %c16] : memref<8x96xf32, #tpu.memory_space<vmem>>, vector<8x4xf32>
    %c0_48 = arith.constant 0 : index
    %c48 = arith.constant 48 : index
    %78 = vector.load %arg6[%c0_48, %c48] : memref<8x96xf32, #tpu.memory_space<vmem>>, vector<8x4xf32>
    %c0_49 = arith.constant 0 : index
    %c80 = arith.constant 80 : index
    %79 = vector.load %arg6[%c0_49, %c80] : memref<8x96xf32, #tpu.memory_space<vmem>>, vector<8x4xf32>
    %cst_50 = arith.constant dense<0.000000e+00> : vector<8x8xf32>
    %80 = tpu.matmul %77, %78, %cst_50 {dimension_numbers = #tpu.dot_dimension_numbers<[1], [1], [0], [0], [0, 0, 1, 0], [], []>} : vector<8x4xf32>, vector<8x4xf32>, vector<8x8xf32> -> vector<8x8xf32>
    %cst_51 = arith.constant 5.000000e-01 : f32
    %81 = vector.broadcast %cst_51 : f32 to vector<8x8xf32>
    %82 = arith.mulf %80, %81 : vector<8x8xf32>
    %cst_52 = arith.constant dense<0xFF800000> : vector<8xf32>
    %83 = vector.multi_reduction <maximumf>, %82, %cst_52 [1] : vector<8x8xf32> to vector<8xf32>
    %84 = vector.shape_cast %83 : vector<8xf32> to vector<8x1xf32>
    %85 = vector.broadcast %84 : vector<8x1xf32> to vector<8x8xf32>
    %86 = arith.subf %82, %85 : vector<8x8xf32>
    %87 = math.exp %86 : vector<8x8xf32>
    %cst_53 = arith.constant dense<0.000000e+00> : vector<8xf32>
    %88 = vector.multi_reduction <add>, %87, %cst_53 [1] : vector<8x8xf32> to vector<8xf32>
    %89 = vector.shape_cast %88 : vector<8xf32> to vector<8x1xf32>
    %90 = tpu.reciprocal %89 {approx = true} : vector<8x1xf32> -> vector<8x1xf32>
    %91 = vector.broadcast %90 : vector<8x1xf32> to vector<8x8xf32>
    %92 = arith.mulf %87, %91 : vector<8x8xf32>
    %cst_54 = arith.constant dense<0.000000e+00> : vector<8x4xf32>
    %93 = tpu.matmul %92, %79, %cst_54 {dimension_numbers = #tpu.dot_dimension_numbers<[1], [0], [0], [1], [0, 0, 1, 1], [], []>} : vector<8x8xf32>, vector<8x4xf32>, vector<8x4xf32> -> vector<8x4xf32>
    %c0_55 = arith.constant 0 : index
    %c16_56 = arith.constant 16 : index
    %94 = vector.load %arg7[%c0_55, %c16_56] : memref<8x32xf32, #tpu.memory_space<vmem>>, vector<8x4xf32>
    tpu.vector_store %arg7[%c0_55, %c16_56], %93 {strides = array<i32>} : memref<8x32xf32, #tpu.memory_space<vmem>>, vector<8x4xf32>,
    %c0_57 = arith.constant 0 : index
    %c20 = arith.constant 20 : index
    %95 = vector.load %arg6[%c0_57, %c20] : memref<8x96xf32, #tpu.memory_space<vmem>>, vector<8x4xf32>
    %c0_58 = arith.constant 0 : index
    %c52 = arith.constant 52 : index
    %96 = vector.load %arg6[%c0_58, %c52] : memref<8x96xf32, #tpu.memory_space<vmem>>, vector<8x4xf32>
    %c0_59 = arith.constant 0 : index
    %c84 = arith.constant 84 : index
    %97 = vector.load %arg6[%c0_59, %c84] : memref<8x96xf32, #tpu.memory_space<vmem>>, vector<8x4xf32>
    %cst_60 = arith.constant dense<0.000000e+00> : vector<8x8xf32>
    %98 = tpu.matmul %95, %96, %cst_60 {dimension_numbers = #tpu.dot_dimension_numbers<[1], [1], [0], [0], [0, 0, 1, 0], [], []>} : vector<8x4xf32>, vector<8x4xf32>, vector<8x8xf32> -> vector<8x8xf32>
    %cst_61 = arith.constant 5.000000e-01 : f32
    %99 = vector.broadcast %cst_61 : f32 to vector<8x8xf32>
    %100 = arith.mulf %98, %99 : vector<8x8xf32>
    %cst_62 = arith.constant dense<0xFF800000> : vector<8xf32>
    %101 = vector.multi_reduction <maximumf>, %100, %cst_62 [1] : vector<8x8xf32> to vector<8xf32>
    %102 = vector.shape_cast %101 : vector<8xf32> to vector<8x1xf32>
    %103 = vector.broadcast %102 : vector<8x1xf32> to vector<8x8xf32>
    %104 = arith.subf %100, %103 : vector<8x8xf32>
    %105 = math.exp %104 : vector<8x8xf32>
    %cst_63 = arith.constant dense<0.000000e+00> : vector<8xf32>
    %106 = vector.multi_reduction <add>, %105, %cst_63 [1] : vector<8x8xf32> to vector<8xf32>
    %107 = vector.shape_cast %106 : vector<8xf32> to vector<8x1xf32>
    %108 = tpu.reciprocal %107 {approx = true} : vector<8x1xf32> -> vector<8x1xf32>
    %109 = vector.broadcast %108 : vector<8x1xf32> to vector<8x8xf32>
    %110 = arith.mulf %105, %109 : vector<8x8xf32>
    %cst_64 = arith.constant dense<0.000000e+00> : vector<8x4xf32>
    %111 = tpu.matmul %110, %97, %cst_64 {dimension_numbers = #tpu.dot_dimension_numbers<[1], [0], [0], [1], [0, 0, 1, 1], [], []>} : vector<8x8xf32>, vector<8x4xf32>, vector<8x4xf32> -> vector<8x4xf32>
    %c0_65 = arith.constant 0 : index
    %c20_66 = arith.constant 20 : index
    %112 = vector.load %arg7[%c0_65, %c20_66] : memref<8x32xf32, #tpu.memory_space<vmem>>, vector<8x4xf32>
    tpu.vector_store %arg7[%c0_65, %c20_66], %111 {strides = array<i32>} : memref<8x32xf32, #tpu.memory_space<vmem>>, vector<8x4xf32>,
    %c0_67 = arith.constant 0 : index
    %c24 = arith.constant 24 : index
    %113 = vector.load %arg6[%c0_67, %c24] : memref<8x96xf32, #tpu.memory_space<vmem>>, vector<8x4xf32>
    %c0_68 = arith.constant 0 : index
    %c56 = arith.constant 56 : index
    %114 = vector.load %arg6[%c0_68, %c56] : memref<8x96xf32, #tpu.memory_space<vmem>>, vector<8x4xf32>
    %c0_69 = arith.constant 0 : index
    %c88 = arith.constant 88 : index
    %115 = vector.load %arg6[%c0_69, %c88] : memref<8x96xf32, #tpu.memory_space<vmem>>, vector<8x4xf32>
    %cst_70 = arith.constant dense<0.000000e+00> : vector<8x8xf32>
    %116 = tpu.matmul %113, %114, %cst_70 {dimension_numbers = #tpu.dot_dimension_numbers<[1], [1], [0], [0], [0, 0, 1, 0], [], []>} : vector<8x4xf32>, vector<8x4xf32>, vector<8x8xf32> -> vector<8x8xf32>
    %cst_71 = arith.constant 5.000000e-01 : f32
    %117 = vector.broadcast %cst_71 : f32 to vector<8x8xf32>
    %118 = arith.mulf %116, %117 : vector<8x8xf32>
    %cst_72 = arith.constant dense<0xFF800000> : vector<8xf32>
    %119 = vector.multi_reduction <maximumf>, %118, %cst_72 [1] : vector<8x8xf32> to vector<8xf32>
    %120 = vector.shape_cast %119 : vector<8xf32> to vector<8x1xf32>
    %121 = vector.broadcast %120 : vector<8x1xf32> to vector<8x8xf32>
    %122 = arith.subf %118, %121 : vector<8x8xf32>
    %123 = math.exp %122 : vector<8x8xf32>
    %cst_73 = arith.constant dense<0.000000e+00> : vector<8xf32>
    %124 = vector.multi_reduction <add>, %123, %cst_73 [1] : vector<8x8xf32> to vector<8xf32>
    %125 = vector.shape_cast %124 : vector<8xf32> to vector<8x1xf32>
    %126 = tpu.reciprocal %125 {approx = true} : vector<8x1xf32> -> vector<8x1xf32>
    %127 = vector.broadcast %126 : vector<8x1xf32> to vector<8x8xf32>
    %128 = arith.mulf %123, %127 : vector<8x8xf32>
    %cst_74 = arith.constant dense<0.000000e+00> : vector<8x4xf32>
    %129 = tpu.matmul %128, %115, %cst_74 {dimension_numbers = #tpu.dot_dimension_numbers<[1], [0], [0], [1], [0, 0, 1, 1], [], []>} : vector<8x8xf32>, vector<8x4xf32>, vector<8x4xf32> -> vector<8x4xf32>
    %c0_75 = arith.constant 0 : index
    %c24_76 = arith.constant 24 : index
    %130 = vector.load %arg7[%c0_75, %c24_76] : memref<8x32xf32, #tpu.memory_space<vmem>>, vector<8x4xf32>
    tpu.vector_store %arg7[%c0_75, %c24_76], %129 {strides = array<i32>} : memref<8x32xf32, #tpu.memory_space<vmem>>, vector<8x4xf32>,
    %c0_77 = arith.constant 0 : index
    %c28 = arith.constant 28 : index
    %131 = vector.load %arg6[%c0_77, %c28] : memref<8x96xf32, #tpu.memory_space<vmem>>, vector<8x4xf32>
    %c0_78 = arith.constant 0 : index
    %c60 = arith.constant 60 : index
    %132 = vector.load %arg6[%c0_78, %c60] : memref<8x96xf32, #tpu.memory_space<vmem>>, vector<8x4xf32>
    %c0_79 = arith.constant 0 : index
    %c92 = arith.constant 92 : index
    %133 = vector.load %arg6[%c0_79, %c92] : memref<8x96xf32, #tpu.memory_space<vmem>>, vector<8x4xf32>
    %cst_80 = arith.constant dense<0.000000e+00> : vector<8x8xf32>
    %134 = tpu.matmul %131, %132, %cst_80 {dimension_numbers = #tpu.dot_dimension_numbers<[1], [1], [0], [0], [0, 0, 1, 0], [], []>} : vector<8x4xf32>, vector<8x4xf32>, vector<8x8xf32> -> vector<8x8xf32>
    %cst_81 = arith.constant 5.000000e-01 : f32
    %135 = vector.broadcast %cst_81 : f32 to vector<8x8xf32>
    %136 = arith.mulf %134, %135 : vector<8x8xf32>
    %cst_82 = arith.constant dense<0xFF800000> : vector<8xf32>
    %137 = vector.multi_reduction <maximumf>, %136, %cst_82 [1] : vector<8x8xf32> to vector<8xf32>
    %138 = vector.shape_cast %137 : vector<8xf32> to vector<8x1xf32>
    %139 = vector.broadcast %138 : vector<8x1xf32> to vector<8x8xf32>
    %140 = arith.subf %136, %139 : vector<8x8xf32>
    %141 = math.exp %140 : vector<8x8xf32>
    %cst_83 = arith.constant dense<0.000000e+00> : vector<8xf32>
    %142 = vector.multi_reduction <add>, %141, %cst_83 [1] : vector<8x8xf32> to vector<8xf32>
    %143 = vector.shape_cast %142 : vector<8xf32> to vector<8x1xf32>
    %144 = tpu.reciprocal %143 {approx = true} : vector<8x1xf32> -> vector<8x1xf32>
    %145 = vector.broadcast %144 : vector<8x1xf32> to vector<8x8xf32>
    %146 = arith.mulf %141, %145 : vector<8x8xf32>
    %cst_84 = arith.constant dense<0.000000e+00> : vector<8x4xf32>
    %147 = tpu.matmul %146, %133, %cst_84 {dimension_numbers = #tpu.dot_dimension_numbers<[1], [0], [0], [1], [0, 0, 1, 1], [], []>} : vector<8x8xf32>, vector<8x4xf32>, vector<8x4xf32> -> vector<8x4xf32>
    %c0_85 = arith.constant 0 : index
    %c28_86 = arith.constant 28 : index
    %148 = vector.load %arg7[%c0_85, %c28_86] : memref<8x32xf32, #tpu.memory_space<vmem>>, vector<8x4xf32>
    tpu.vector_store %arg7[%c0_85, %c28_86], %147 {strides = array<i32>} : memref<8x32xf32, #tpu.memory_space<vmem>>, vector<8x4xf32>,
    %c0_87 = arith.constant 0 : index
    %c0_88 = arith.constant 0 : index
    %149 = vector.load %arg7[%c0_87, %c0_88] : memref<8x32xf32, #tpu.memory_space<vmem>>, vector<8x32xf32>
    %c0_89 = arith.constant 0 : index
    %c0_90 = arith.constant 0 : index
    %150 = vector.load %arg3[%c0_89, %c0_90] : memref<32x32xf32, #tpu.memory_space<vmem>>, vector<32x32xf32>
    %cst_91 = arith.constant dense<0.000000e+00> : vector<8x32xf32>
    %151 = tpu.matmul %149, %150, %cst_91 {dimension_numbers = #tpu.dot_dimension_numbers<[1], [1], [0], [0], [0, 0, 1, 0], [], []>} : vector<8x32xf32>, vector<32x32xf32>, vector<8x32xf32> -> vector<8x32xf32>
    %c0_92 = arith.constant 0 : index
    %c0_93 = arith.constant 0 : index
    %152 = vector.load %arg4[%c0_92, %c0_93] : memref<1x32xf32, #tpu.memory_space<vmem>>, vector<1x32xf32>
    %153 = vector.broadcast %152 : vector<1x32xf32> to vector<8x32xf32>
    %154 = arith.addf %151, %153 : vector<8x32xf32>
    %c0_94 = arith.constant 0 : index
    %c0_95 = arith.constant 0 : index
    %c0_96 = arith.constant 0 : index
    %155 = vector.load %arg5[%c0_94, %c0_95, %c0_96] : memref<1x8x32xf32, #tpu.memory_space<vmem>>, vector<1x8x32xf32>
    %156 = vector.shape_cast %155 : vector<1x8x32xf32> to vector<8x32xf32>
    %157 = vector.shape_cast %154 : vector<8x32xf32> to vector<1x8x32xf32>
    tpu.vector_store %arg5[%c0_94, %c0_95, %c0_96], %157 {strides = array<i32>} : memref<1x8x32xf32, #tpu.memory_space<vmem>>, vector<1x8x32xf32>,
    return
  }
  func.func @transform_0(%arg0: i32) -> (i32, i32, i32) {
    %c0_i32 = arith.constant 0 : i32
    %c0_i32_0 = arith.constant 0 : i32
    %c0_i32_1 = arith.constant 0 : i32
    return %arg0, %c0_i32, %c0_i32_0 : i32, i32, i32
  }
  func.func @transform_1(%arg0: i32) -> (i32, i32) {
    %c0_i32 = arith.constant 0 : i32
    %c0_i32_0 = arith.constant 0 : i32
    %c0_i32_1 = arith.constant 0 : i32
    return %c0_i32, %c0_i32_0 : i32, i32
  }
  func.func @transform_2(%arg0: i32) -> (i32, i32) {
    %c0_i32 = arith.constant 0 : i32
    %c0_i32_0 = arith.constant 0 : i32
    %c0_i32_1 = arith.constant 0 : i32
    return %c0_i32, %c0_i32_0 : i32, i32
  }
  func.func @transform_3(%arg0: i32) -> (i32, i32) {
    %c0_i32 = arith.constant 0 : i32
    %c0_i32_0 = arith.constant 0 : i32
    %c0_i32_1 = arith.constant 0 : i32
    return %c0_i32, %c0_i32_0 : i32, i32
  }
  func.func @transform_4(%arg0: i32) -> (i32, i32, i32) {
    %c0_i32 = arith.constant 0 : i32
    %c0_i32_0 = arith.constant 0 : i32
    %c0_i32_1 = arith.constant 0 : i32
    return %arg0, %c0_i32, %c0_i32_0 : i32, i32, i32
  }
}

</mosaic_0001>

<llo_original>
// kernel: tpu_custom_call.1
$region0: #{tpu_custom_call.1}
  #allocation0 [shape = 'u32[]', space=smem, size = 0x4, offset = 0x4, fixed_abs, tag = 'smem constant byte address 0x4 - core index']
  #allocation1 [shape = 'u32[72,128]{1,0:T(1,128)}', space=vmem, size = 0x9000, scoped, tag = 'internal scratch']
  #allocation2 [shape = 'f32[8,96]{1,0:T(8,128)}', space=vmem, size = 0x1000, scoped, tag = 'scratch operand']
  #allocation3 [shape = 'f32[8,32]{1,0:T(8,128)}', space=vmem, size = 0x1000, scoped, tag = 'scratch operand']
  %s0 = inlined_call_operand.vmem [shape: f32[2,8,32], index: 0, kind: input, shape index: {}]
  %s1 = inlined_call_operand.vmem [shape: f32[96,32], index: 1, kind: input, shape index: {}]
  %s2 = inlined_call_operand.vmem [shape: f32[32,32], index: 2, kind: input, shape index: {}]
  %s3 = inlined_call_operand.vmem [shape: f32[1,32], index: 3, kind: input, shape index: {}]
  %s4 = inlined_call_operand.hbm [shape: f32[2,8,32], index: 4, kind: output, shape index: {}]
  %s5 = sld [smem:[#allocation0]]
  $region49: #{tpu_custom_call.1} parent=0
    _
  %s7 = ssub.s32 1, %s5
  %s8 = scalar_select 0, %s7, %s5
  $region1: #{tpu_custom_call.1} parent=0
    #allocation4 [shape = 'u8[8192]{0}', space=vmem, size = 0x2000, scoped, tag = 'output window, operand 0']
    #allocation5 [shape = 's32[2]{0}', space=sflag, size = 0x8, scoped, tag = 'scoped memory for tpu_custom_call.1']
    %9 = vsyncpa [#allocation5], 0
    %s10 = scalar_lea.sflag [#allocation5], 1
    %11 = vsyncpa %s10, 0
    loop: start=0, step=1, limit=4
    $region2: #{tpu_custom_call.1} parent=1 // loop_pre_header
      _
    $region3: #{tpu_custom_call.1} parent=1 // loop_header
      %s13 = sphi 0, %s17
      %p14 = scmp.ge.s32.totalorder %s13, 4
      %s23 = sphi 0, %s25
      %s26 = sphi 0, %s23
      %s27 = sphi 0, %s26
      %s43 = sphi 0, %s27
      %s47 = sphi 0, %s47
      %s49 = sphi 0, %s47
      %s50 = sphi 0, %s49
      %s64 = sphi 0, %s50
      %s68 = sphi 0, %s68
      %s70 = sphi 0, %s68
      %s71 = sphi 0, %s70
      %s85 = sphi 0, %s71
      %s89 = sphi 0, %s89
      %s91 = sphi 0, %s89
      %s92 = sphi 0, %s91
      %s106 = sphi 0, %s92
      %s112 = sphi 0, %s114
      %s115 = sphi 0, %s112
      %s116 = sphi 0, %s115
      %s132 = sphi 0, %s116
    $region4: #{tpu_custom_call.1} parent=1 // loop_header_branch
      %16 = sbr.rel (%p14) target = $region8
    $region5: #{tpu_custom_call.1} parent=1 // loop_body
      %s18 = ssub.s32 %s13, 1
      %s19 = ssub.s32 %s13, 2
      %s20 = sadd.s32 %s13, 1
      %s21 = ssub.s32 %s13, %s20
      %p22 = scmp.eq.s32.totalorder %s21, 0
      %s24 = sadd.s32 %s23, 1
      %s25 = scalar_select %p22, %s23, %s24
      %p28 = pneg %p22
      %p29 = scmp.eq.s32.totalorder %s13, 1
      %p30 = por %p28, %p29
      %p31 = scmp.ne.s32.totalorder %s23, %s26
      %p32 = scmp.eq.s32.totalorder %s13, 0
      %p33 = por %p31, %p32
      %p34 = scmp.ne.s32.totalorder %s23, %s26
      %p35 = scmp.eq.s32.totalorder %s18, 1
      %p36 = por %p34, %p35
      %p37 = scmp.ne.s32.totalorder %s26, %s27
      %p38 = scmp.eq.s32.totalorder %s18, 0
      %p39 = por %p37, %p38
      %p40 = scmp.ne.s32.totalorder %s26, %s27
      %p41 = scmp.eq.s32.totalorder %s19, 1
      %p42 = por %p40, %p41
      %p44 = scmp.ne.s32.totalorder %s27, %s43
      %p45 = scmp.eq.s32.totalorder %s19, 0
      %p46 = por %p44, %p45
      %s48 = sadd.s32 %s47, 1
      %p51 = scmp.eq.s32.totalorder %s13, 1
      %p52 = scmp.ne.s32.totalorder %s47, %s49
      %p53 = scmp.eq.s32.totalorder %s13, 0
      %p54 = por %p52, %p53
      %p55 = scmp.ne.s32.totalorder %s47, %s49
      %p56 = scmp.eq.s32.totalorder %s18, 1
      %p57 = por %p55, %p56
      %p58 = scmp.ne.s32.totalorder %s49, %s50
      %p59 = scmp.eq.s32.totalorder %s18, 0
      %p60 = por %p58, %p59
      %p61 = scmp.ne.s32.totalorder %s49, %s50
      %p62 = scmp.eq.s32.totalorder %s19, 1
      %p63 = por %p61, %p62
      %p65 = scmp.ne.s32.totalorder %s50, %s64
      %p66 = scmp.eq.s32.totalorder %s19, 0
      %p67 = por %p65, %p66
      %s69 = sadd.s32 %s68, 1
      %p72 = scmp.eq.s32.totalorder %s13, 1
      %p73 = scmp.ne.s32.totalorder %s68, %s70
      %p74 = scmp.eq.s32.totalorder %s13, 0
      %p75 = por %p73, %p74
      %p76 = scmp.ne.s32.totalorder %s68, %s70
      %p77 = scmp.eq.s32.totalorder %s18, 1
      %p78 = por %p76, %p77
      %p79 = scmp.ne.s32.totalorder %s70, %s71
      %p80 = scmp.eq.s32.totalorder %s18, 0
      %p81 = por %p79, %p80
      %p82 = scmp.ne.s32.totalorder %s70, %s71
      %p83 = scmp.eq.s32.totalorder %s19, 1
      %p84 = por %p82, %p83
      %p86 = scmp.ne.s32.totalorder %s71, %s85
      %p87 = scmp.eq.s32.totalorder %s19, 0
      %p88 = por %p86, %p87
      %s90 = sadd.s32 %s89, 1
      %p93 = scmp.eq.s32.totalorder %s13, 1
      %p94 = scmp.ne.s32.totalorder %s89, %s91
      %p95 = scmp.eq.s32.totalorder %s13, 0
      %p96 = por %p94, %p95
      %p97 = scmp.ne.s32.totalorder %s89, %s91
      %p98 = scmp.eq.s32.totalorder %s18, 1
      %p99 = por %p97, %p98
      %p100 = scmp.ne.s32.totalorder %s91, %s92
      %p101 = scmp.eq.s32.totalorder %s18, 0
      %p102 = por %p100, %p101
      %p103 = scmp.ne.s32.totalorder %s91, %s92
      %p104 = scmp.eq.s32.totalorder %s19, 1
      %p105 = por %p103, %p104
      %p107 = scmp.ne.s32.totalorder %s92, %s106
      %p108 = scmp.eq.s32.totalorder %s19, 0
      %p109 = por %p107, %p108
      %s110 = ssub.s32 %s13, %s20
      %p111 = scmp.eq.s32.totalorder %s110, 0
      %s113 = sadd.s32 %s112, 1
      %s114 = scalar_select %p111, %s112, %s113
      %p117 = pneg %p111
      %p118 = scmp.eq.s32.totalorder %s13, 1
      %p119 = por %p117, %p118
      %p120 = scmp.ne.s32.totalorder %s112, %s115
      %p121 = scmp.eq.s32.totalorder %s13, 0
      %p122 = por %p120, %p121
      %p123 = scmp.ne.s32.totalorder %s112, %s115
      %p124 = scmp.eq.s32.totalorder %s18, 1
      %p125 = por %p123, %p124
      %p126 = scmp.ne.s32.totalorder %s115, %s116
      %p127 = scmp.eq.s32.totalorder %s18, 0
      %p128 = por %p126, %p127
      %p129 = scmp.ne.s32.totalorder %s115, %s116
      %p130 = scmp.eq.s32.totalorder %s19, 1
      %p131 = por %p129, %p130
      %p133 = scmp.ne.s32.totalorder %s116, %s132
      %p134 = scmp.eq.s32.totalorder %s19, 0
      %p135 = por %p133, %p134
      %p136 = scmp.le.s32.totalorder 1, %s13
      %p137 = scmp.lt.s32.totalorder %s13, 3
      %p138 = pnand %p136, %p137
      %p139 = pneg %p138
      // Predicated region
      $region9: #{tpu_custom_call.1} parent=5 // pred_check
        _
      $region10: #{tpu_custom_call.1} parent=5 // pred_check_branch
        %141 = sbr.rel (%p138) target = $region12
      $region11: #{tpu_custom_call.1} parent=5 // pred_region
        %s142 = ssub.s32 %s13, 1
        // Predicated region
        $region13: #{tpu_custom_call.1} parent=11 // pred_check
          %p143 = pneg %p60
        $region14: #{tpu_custom_call.1} parent=11 // pred_check_branch
          %145 = sbr.rel (%p143) target = $region16
        $region15: #{tpu_custom_call.1} parent=11 // pred_region
          _
        $region16: #{tpu_custom_call.1} parent=11 // pred_fallthru
          _
        // Predicated region
        $region17: #{tpu_custom_call.1} parent=11 // pred_check
          %p146 = pneg %p81
        $region18: #{tpu_custom_call.1} parent=11 // pred_check_branch
          %148 = sbr.rel (%p146) target = $region20
        $region19: #{tpu_custom_call.1} parent=11 // pred_region
          _
        $region20: #{tpu_custom_call.1} parent=11 // pred_fallthru
          _
        // Predicated region
        $region21: #{tpu_custom_call.1} parent=11 // pred_check
          %p149 = pneg %p102
        $region22: #{tpu_custom_call.1} parent=11 // pred_check_branch
          %151 = sbr.rel (%p149) target = $region24
        $region23: #{tpu_custom_call.1} parent=11 // pred_region
          _
        $region24: #{tpu_custom_call.1} parent=11 // pred_fallthru
          _
      $region12: #{tpu_custom_call.1} parent=5 // pred_fallthru
        _
      %p152 = scmp.lt.s32.totalorder %s13, 2
      // Predicated region
      $region25: #{tpu_custom_call.1} parent=5 // pred_check
        %p153 = pneg %p152
      $region26: #{tpu_custom_call.1} parent=5 // pred_check_branch
        %155 = sbr.rel (%p153) target = $region28
      $region27: #{tpu_custom_call.1} parent=5 // pred_region
        // Predicated region
        $region29: #{tpu_custom_call.1} parent=27 // pred_check
          %p156 = pneg %p33
        $region30: #{tpu_custom_call.1} parent=27 // pred_check_branch
          %158 = sbr.rel (%p156) target = $region32
        $region31: #{tpu_custom_call.1} parent=27 // pred_region
          %p159 = scmp.lt.s32.totalorder %s13, 1
          %s160 = scalar_select %p159, %s13, 1
          %s161 = smul.addr %s160, 8
          %s162 = scalar_lea.vmem %s0, %s161
        $region32: #{tpu_custom_call.1} parent=27 // pred_fallthru
          _
      $region28: #{tpu_custom_call.1} parent=5 // pred_fallthru
        _
      %p163 = scmp.le.s32.totalorder 1, %s13
      %p164 = scmp.lt.s32.totalorder %s13, 3
      %p165 = pnand %p163, %p164
      %p166 = pneg %p165
      // Predicated region
      $region33: #{tpu_custom_call.1} parent=5 // pred_check
        _
      $region34: #{tpu_custom_call.1} parent=5 // pred_check_branch
        %168 = sbr.rel (%p165) target = $region36
      $region35: #{tpu_custom_call.1} parent=5 // pred_region
        %s169 = ssub.s32 %s13, 1
        %p170 = scmp.lt.s32.totalorder %s18, 1
        %s171 = scalar_select %p170, %s18, 1
        %s172 = smul.addr %s171, 8
        %s173 = scalar_lea.vmem %s0, %s172
        %p174 = pneg %p39
        %p175 = pneg %p36
        %p176 = pneg %p60
        %p177 = pneg %p57
        %p178 = pneg %p81
        %p179 = pneg %p78
        %p180 = pneg %p102
        %p181 = pneg %p99
        %p182 = pneg %p128
        %p183 = pneg %p125
        %s184 = sand.u32 %s115, 1
        %s185 = scalar_lea.sflag [#allocation5], %s184
        %s186 = sand.u32 %s115, 1
        %s187 = smul.addr %s186, 8
        %s188 = scalar_lea.vmem [#allocation4], %s187
        %p189 = scmp.lt.s32.totalorder %s18, 1
        %s190 = scalar_select %p189, %s18, 1
        %s191 = smul.addr %s190, 8
        %s192 = scalar_lea.vmem %s0, %s191
        %v193 = vld [vmem:[%s192] sm:$0xff]
        %v194 = vld [vmem:[%s1] sm:$0xff]
        %v195 = vld [vmem:[%s1 + $0x8] sm:$0xff]
        %v196 = vld [vmem:[%s1 + $0x10] sm:$0xff]
        %v197 = vld [vmem:[%s1 + $0x18] sm:$0xff]
        %v198 = vld [vmem:[%s1 + $0x20] sm:$0xff]
        %v199 = vld [vmem:[%s1 + $0x28] sm:$0xff]
        %v200 = vld [vmem:[%s1 + $0x30] sm:$0xff]
        %v201 = vld [vmem:[%s1 + $0x38] sm:$0xff]
        %v202 = vld [vmem:[%s1 + $0x40] sm:$0xff]
        %v203 = vld [vmem:[%s1 + $0x48] sm:$0xff]
        %v204 = vld [vmem:[%s1 + $0x50] sm:$0xff]
        %v205 = vld [vmem:[%s1 + $0x58] sm:$0xff]
        %vm206 = vcmask 261120
        %v208 = vsel %vm206, %v193, 0
        %v211 = vsel %vm206, %v194, 0
        %v214 = vsel %vm206, %v195, 0
        %v217 = vsel %vm206, %v196, 0
        %v220 = vsel %vm206, %v197, 0
        %v223 = vsel %vm206, %v198, 0
        %v226 = vsel %vm206, %v199, 0
        %v229 = vsel %vm206, %v200, 0
        %v232 = vsel %vm206, %v201, 0
        %v235 = vsel %vm206, %v202, 0
        %v238 = vsel %vm206, %v203, 0
        %v241 = vsel %vm206, %v204, 0
        %v244 = vsel %vm206, %v205, 0
        %246 = vmatpush.xpose.msra.mxu0 0.0
        %247 = vmatpush.xpose.msra.mxu0 0.0
        %248 = vmatpush.xpose.msra.mxu0 0.0
        %249 = vmatpush.xpose.msra.mxu0 0.0
        %250 = vmatpush.xpose.msra.mxu0 %v244
        %251 = vmatpush.xpose.msra.mxu0 %v241
        %252 = vmatpush.xpose.msra.mxu0 %v238
        %253 = vmatpush.xpose.msra.mxu0 %v235
        %254 = vmatpush.xpose.msra.mxu0 %v232
        %255 = vmatpush.xpose.msra.mxu0 %v229
        %256 = vmatpush.xpose.msra.mxu0 %v226
        %257 = vmatpush.xpose.msra.mxu0 %v223
        %258 = vmatpush.xpose.msra.mxu0 %v220
        %259 = vmatpush.xpose.msra.mxu0 %v217
        %260 = vmatpush.xpose.msra.mxu0 %v214
        %261 = vmatpush.xpose.msra.mxu0 %v211
        %262 = vmatmul.f32.gmra.mxu0 %v208
        %v263 = vpop.f32.mrf.mxu0
        %v264 = vadd.f32 0.0, %v263
        %265 = vdwg.mxu0
        %vm266 = vcmask 785408
        %267 = vst.msk [vmem:[#allocation2] sm:$0xff] %vm266, %v264
        %v268 = vld [vmem:[#allocation2] sm:$0xff]
        %270 = vrot.lane.b32.xlu0 %v268, 96
        %v271 = vpop.permute.xlu0 %270
        %vm272 = vcmask 31744
        %v273 = vsel %vm272, %v268, 0
        %v275 = vsel %vm272, %v271, 0
        %277 = vmatpush.xpose.msra.mxu0 0.0
        %278 = vmatpush.xpose.msra.mxu0 0.0
        %279 = vmatpush.xpose.msra.mxu0 0.0
        %280 = vmatpush.xpose.msra.mxu0 0.0
        %281 = vmatpush.xpose.msra.mxu0 0.0
        %282 = vmatpush.xpose.msra.mxu0 0.0
        %283 = vmatpush.xpose.msra.mxu0 0.0
        %284 = vmatpush.xpose.msra.mxu0 0.0
        %285 = vmatpush.xpose.msra.mxu0 0.0
        %286 = vmatpush.xpose.msra.mxu0 0.0
        %287 = vmatpush.xpose.msra.mxu0 0.0
        %288 = vmatpush.xpose.msra.mxu0 0.0
        %289 = vmatpush.xpose.msra.mxu0 0.0
        %290 = vmatpush.xpose.msra.mxu0 0.0
        %291 = vmatpush.xpose.msra.mxu0 0.0
        %292 = vmatpush.xpose.msra.mxu0 %v275
        %293 = vmatmul.f32.gmra.mxu0 %v273
        %v294 = vpop.f32.mrf.mxu0
        %v295 = vadd.f32 0.0, %v294
        %296 = vdwg.mxu0
        %v297 = vmul.f32 %v295, 0.5
        %vm298 = vcmask 64512
        %v299 = vsel %vm298, %v297, -inf
        %300 = vmax.xlane.f32.xlu0 %v299
        %v301 = vpop.xlane.xlu0 %300
        %v302 = vsub.f32 %v297, %v301
        %v303 = vmul.f32 %v302, 1.442695
        %v304 = vpow.pop %v303
        %v305 = vsel %vm298, %v304, 0.0
        %306 = vadd.xlane.f32.xlu0 %v305
        %v307 = vpop.xlane.xlu0 %306
        %v308 = vrcp.pop %v307
        %v309 = vmul.f32 %v304, %v308
        %310 = vrot.lane.b32.xlu0 %v268, 64
        %v311 = vpop.permute.xlu0 %310
        %v314 = vsel %vm298, %v309, 0
        %316 = vmatpush.msra.mxu0 0.0
        %317 = vmatpush.msra.mxu0 0.0
        %318 = vmatpush.msra.mxu0 0.0
        %319 = vmatpush.msra.mxu0 0.0
        %320 = vmatpush.msra.mxu0 0.0
        %321 = vmatpush.msra.mxu0 0.0
        %322 = vmatpush.msra.mxu0 0.0
        %323 = vmatpush.msra.mxu0 0.0
        %324 = vmatpush.msra.mxu0 0.0
        %325 = vmatpush.msra.mxu0 0.0
        %326 = vmatpush.msra.mxu0 0.0
        %327 = vmatpush.msra.mxu0 0.0
        %328 = vmatpush.msra.mxu0 0.0
        %329 = vmatpush.msra.mxu0 0.0
        %330 = vmatpush.msra.mxu0 0.0
        %331 = vmatpush.msra.mxu0 %v311
        %332 = vmatmul.f32.gmra.mxu0 %v314
        %v333 = vpop.f32.mrf.mxu0
        %v334 = vadd.f32 0.0, %v333
        %335 = vdwg.mxu0
        %336 = vst.msk [vmem:[#allocation3] sm:$0xff] %vm272, %v334
        %v337 = vld [vmem:[#allocation2] sm:$0xff]
        %339 = vrot.lane.b32.xlu0 %v337, 124
        %v340 = vpop.permute.xlu0 %339
        %341 = vrot.lane.b32.xlu0 %v337, 92
        %v342 = vpop.permute.xlu0 %341
        %v343 = vsel %vm272, %v340, 0
        %v345 = vsel %vm272, %v342, 0
        %347 = vmatpush.xpose.msra.mxu0 0.0
        %348 = vmatpush.xpose.msra.mxu0 0.0
        %349 = vmatpush.xpose.msra.mxu0 0.0
        %350 = vmatpush.xpose.msra.mxu0 0.0
        %351 = vmatpush.xpose.msra.mxu0 0.0
        %352 = vmatpush.xpose.msra.mxu0 0.0
        %353 = vmatpush.xpose.msra.mxu0 0.0
        %354 = vmatpush.xpose.msra.mxu0 0.0
        %355 = vmatpush.xpose.msra.mxu0 0.0
        %356 = vmatpush.xpose.msra.mxu0 0.0
        %357 = vmatpush.xpose.msra.mxu0 0.0
        %358 = vmatpush.xpose.msra.mxu0 0.0
        %359 = vmatpush.xpose.msra.mxu0 0.0
        %360 = vmatpush.xpose.msra.mxu0 0.0
        %361 = vmatpush.xpose.msra.mxu0 0.0
        %362 = vmatpush.xpose.msra.mxu0 %v345
        %363 = vmatmul.f32.gmra.mxu0 %v343
        %v364 = vpop.f32.mrf.mxu0
        %v365 = vadd.f32 0.0, %v364
        %366 = vdwg.mxu0
        %v367 = vmul.f32 %v365, 0.5
        %v368 = vsel %vm298, %v367, -inf
        %369 = vmax.xlane.f32.xlu0 %v368
        %v370 = vpop.xlane.xlu0 %369
        %v371 = vsub.f32 %v367, %v370
        %v372 = vmul.f32 %v371, 1.442695
        %v373 = vpow.pop %v372
        %v374 = vsel %vm298, %v373, 0.0
        %375 = vadd.xlane.f32.xlu0 %v374
        %v376 = vpop.xlane.xlu0 %375
        %v377 = vrcp.pop %v376
        %v378 = vmul.f32 %v373, %v377
        %379 = vrot.lane.b32.xlu0 %v337, 60
        %v380 = vpop.permute.xlu0 %379
        %v383 = vsel %vm298, %v378, 0
        %385 = vmatpush.msra.mxu0 0.0
        %386 = vmatpush.msra.mxu0 0.0
        %387 = vmatpush.msra.mxu0 0.0
        %388 = vmatpush.msra.mxu0 0.0
        %389 = vmatpush.msra.mxu0 0.0
        %390 = vmatpush.msra.mxu0 0.0
        %391 = vmatpush.msra.mxu0 0.0
        %392 = vmatpush.msra.mxu0 0.0
        %393 = vmatpush.msra.mxu0 0.0
        %394 = vmatpush.msra.mxu0 0.0
        %395 = vmatpush.msra.mxu0 0.0
        %396 = vmatpush.msra.mxu0 0.0
        %397 = vmatpush.msra.mxu0 0.0
        %398 = vmatpush.msra.mxu0 0.0
        %399 = vmatpush.msra.mxu0 0.0
        %400 = vmatpush.msra.mxu0 %v380
        %401 = vmatmul.f32.gmra.mxu0 %v383
        %v402 = vpop.f32.mrf.mxu0
        %v403 = vadd.f32 0.0, %v402
        %404 = vdwg.mxu0
        %406 = vrot.lane.b32.xlu0 %v403, 4
        %v407 = vpop.permute.xlu0 %406
        %vm409 = vcmask 64544
        %410 = vst.msk [vmem:[#allocation3] sm:$0xff] %vm409, %v407
        %v411 = vld [vmem:[#allocation2] sm:$0xff]
        %413 = vrot.lane.b32.xlu0 %v411, 120
        %v414 = vpop.permute.xlu0 %413
        %415 = vrot.lane.b32.xlu0 %v411, 88
        %v416 = vpop.permute.xlu0 %415
        %v417 = vsel %vm272, %v414, 0
        %v419 = vsel %vm272, %v416, 0
        %421 = vmatpush.xpose.msra.mxu0 0.0
        %422 = vmatpush.xpose.msra.mxu0 0.0
        %423 = vmatpush.xpose.msra.mxu0 0.0
        %424 = vmatpush.xpose.msra.mxu0 0.0
        %425 = vmatpush.xpose.msra.mxu0 0.0
        %426 = vmatpush.xpose.msra.mxu0 0.0
        %427 = vmatpush.xpose.msra.mxu0 0.0
        %428 = vmatpush.xpose.msra.mxu0 0.0
        %429 = vmatpush.xpose.msra.mxu0 0.0
        %430 = vmatpush.xpose.msra.mxu0 0.0
        %431 = vmatpush.xpose.msra.mxu0 0.0
        %432 = vmatpush.xpose.msra.mxu0 0.0
        %433 = vmatpush.xpose.msra.mxu0 0.0
        %434 = vmatpush.xpose.msra.mxu0 0.0
        %435 = vmatpush.xpose.msra.mxu0 0.0
        %436 = vmatpush.xpose.msra.mxu0 %v419
        %437 = vmatmul.f32.gmra.mxu0 %v417
        %v438 = vpop.f32.mrf.mxu0
        %v439 = vadd.f32 0.0, %v438
        %440 = vdwg.mxu0
        %v441 = vmul.f32 %v439, 0.5
        %v442 = vsel %vm298, %v441, -inf
        %443 = vmax.xlane.f32.xlu0 %v442
        %v444 = vpop.xlane.xlu0 %443
        %v445 = vsub.f32 %v441, %v444
        %v446 = vmul.f32 %v445, 1.442695
        %v447 = vpow.pop %v446
        %v448 = vsel %vm298, %v447, 0.0
        %449 = vadd.xlane.f32.xlu0 %v448
        %v450 = vpop.xlane.xlu0 %449
        %v451 = vrcp.pop %v450
        %v452 = vmul.f32 %v447, %v451
        %453 = vrot.lane.b32.xlu0 %v411, 56
        %v454 = vpop.permute.xlu0 %453
        %v457 = vsel %vm298, %v452, 0
        %459 = vmatpush.msra.mxu0 0.0
        %460 = vmatpush.msra.mxu0 0.0
        %461 = vmatpush.msra.mxu0 0.0
        %462 = vmatpush.msra.mxu0 0.0
        %463 = vmatpush.msra.mxu0 0.0
        %464 = vmatpush.msra.mxu0 0.0
        %465 = vmatpush.msra.mxu0 0.0
        %466 = vmatpush.msra.mxu0 0.0
        %467 = vmatpush.msra.mxu0 0.0
        %468 = vmatpush.msra.mxu0 0.0
        %469 = vmatpush.msra.mxu0 0.0
        %470 = vmatpush.msra.mxu0 0.0
        %471 = vmatpush.msra.mxu0 0.0
        %472 = vmatpush.msra.mxu0 0.0
        %473 = vmatpush.msra.mxu0 0.0
        %474 = vmatpush.msra.mxu0 %v454
        %475 = vmatmul.f32.gmra.mxu0 %v457
        %v476 = vpop.f32.mrf.mxu0
        %v477 = vadd.f32 0.0, %v476
        %478 = vdwg.mxu0
        %480 = vrot.lane.b32.xlu0 %v477, 8
        %v481 = vpop.permute.xlu0 %480
        %vm483 = vcmask 97344
        %484 = vst.msk [vmem:[#allocation3] sm:$0xff] %vm483, %v481
        %v485 = vld [vmem:[#allocation2] sm:$0xff]
        %487 = vrot.lane.b32.xlu0 %v485, 116
        %v488 = vpop.permute.xlu0 %487
        %489 = vrot.lane.b32.xlu0 %v485, 84
        %v490 = vpop.permute.xlu0 %489
        %v491 = vsel %vm272, %v488, 0
        %v493 = vsel %vm272, %v490, 0
        %495 = vmatpush.xpose.msra.mxu0 0.0
        %496 = vmatpush.xpose.msra.mxu0 0.0
        %497 = vmatpush.xpose.msra.mxu0 0.0
        %498 = vmatpush.xpose.msra.mxu0 0.0
        %499 = vmatpush.xpose.msra.mxu0 0.0
        %500 = vmatpush.xpose.msra.mxu0 0.0
        %501 = vmatpush.xpose.msra.mxu0 0.0
        %502 = vmatpush.xpose.msra.mxu0 0.0
        %503 = vmatpush.xpose.msra.mxu0 0.0
        %504 = vmatpush.xpose.msra.mxu0 0.0
        %505 = vmatpush.xpose.msra.mxu0 0.0
        %506 = vmatpush.xpose.msra.mxu0 0.0
        %507 = vmatpush.xpose.msra.mxu0 0.0
        %508 = vmatpush.xpose.msra.mxu0 0.0
        %509 = vmatpush.xpose.msra.mxu0 0.0
        %510 = vmatpush.xpose.msra.mxu0 %v493
        %511 = vmatmul.f32.gmra.mxu0 %v491
        %v512 = vpop.f32.mrf.mxu0
        %v513 = vadd.f32 0.0, %v512
        %514 = vdwg.mxu0
        %v515 = vmul.f32 %v513, 0.5
        %v516 = vsel %vm298, %v515, -inf
        %517 = vmax.xlane.f32.xlu0 %v516
        %v518 = vpop.xlane.xlu0 %517
        %v519 = vsub.f32 %v515, %v518
        %v520 = vmul.f32 %v519, 1.442695
        %v521 = vpow.pop %v520
        %v522 = vsel %vm298, %v521, 0.0
        %523 = vadd.xlane.f32.xlu0 %v522
        %v524 = vpop.xlane.xlu0 %523
        %v525 = vrcp.pop %v524
        %v526 = vmul.f32 %v521, %v525
        %527 = vrot.lane.b32.xlu0 %v485, 52
        %v528 = vpop.permute.xlu0 %527
        %v531 = vsel %vm298, %v526, 0
        %533 = vmatpush.msra.mxu0 0.0
        %534 = vmatpush.msra.mxu0 0.0
        %535 = vmatpush.msra.mxu0 0.0
        %536 = vmatpush.msra.mxu0 0.0
        %537 = vmatpush.msra.mxu0 0.0
        %538 = vmatpush.msra.mxu0 0.0
        %539 = vmatpush.msra.mxu0 0.0
        %540 = vmatpush.msra.mxu0 0.0
        %541 = vmatpush.msra.mxu0 0.0
        %542 = vmatpush.msra.mxu0 0.0
        %543 = vmatpush.msra.mxu0 0.0
        %544 = vmatpush.msra.mxu0 0.0
        %545 = vmatpush.msra.mxu0 0.0
        %546 = vmatpush.msra.mxu0 0.0
        %547 = vmatpush.msra.mxu0 0.0
        %548 = vmatpush.msra.mxu0 %v528
        %549 = vmatmul.f32.gmra.mxu0 %v531
        %v550 = vpop.f32.mrf.mxu0
        %v551 = vadd.f32 0.0, %v550
        %552 = vdwg.mxu0
        %554 = vrot.lane.b32.xlu0 %v551, 12
        %v555 = vpop.permute.xlu0 %554
        %vm557 = vcmask 130144
        %558 = vst.msk [vmem:[#allocation3] sm:$0xff] %vm557, %v555
        %v559 = vld [vmem:[#allocation2] sm:$0xff]
        %561 = vrot.lane.b32.xlu0 %v559, 112
        %v562 = vpop.permute.xlu0 %561
        %563 = vrot.lane.b32.xlu0 %v559, 80
        %v564 = vpop.permute.xlu0 %563
        %v565 = vsel %vm272, %v562, 0
        %v567 = vsel %vm272, %v564, 0
        %569 = vmatpush.xpose.msra.mxu0 0.0
        %570 = vmatpush.xpose.msra.mxu0 0.0
        %571 = vmatpush.xpose.msra.mxu0 0.0
        %572 = vmatpush.xpose.msra.mxu0 0.0
        %573 = vmatpush.xpose.msra.mxu0 0.0
        %574 = vmatpush.xpose.msra.mxu0 0.0
        %575 = vmatpush.xpose.msra.mxu0 0.0
        %576 = vmatpush.xpose.msra.mxu0 0.0
        %577 = vmatpush.xpose.msra.mxu0 0.0
        %578 = vmatpush.xpose.msra.mxu0 0.0
        %579 = vmatpush.xpose.msra.mxu0 0.0
        %580 = vmatpush.xpose.msra.mxu0 0.0
        %581 = vmatpush.xpose.msra.mxu0 0.0
        %582 = vmatpush.xpose.msra.mxu0 0.0
        %583 = vmatpush.xpose.msra.mxu0 0.0
        %584 = vmatpush.xpose.msra.mxu0 %v567
        %585 = vmatmul.f32.gmra.mxu0 %v565
        %v586 = vpop.f32.mrf.mxu0
        %v587 = vadd.f32 0.0, %v586
        %588 = vdwg.mxu0
        %v589 = vmul.f32 %v587, 0.5
        %v590 = vsel %vm298, %v589, -inf
        %591 = vmax.xlane.f32.xlu0 %v590
        %v592 = vpop.xlane.xlu0 %591
        %v593 = vsub.f32 %v589, %v592
        %v594 = vmul.f32 %v593, 1.442695
        %v595 = vpow.pop %v594
        %v596 = vsel %vm298, %v595, 0.0
        %597 = vadd.xlane.f32.xlu0 %v596
        %v598 = vpop.xlane.xlu0 %597
        %v599 = vrcp.pop %v598
        %v600 = vmul.f32 %v595, %v599
        %601 = vrot.lane.b32.xlu0 %v559, 48
        %v602 = vpop.permute.xlu0 %601
        %v605 = vsel %vm298, %v600, 0
        %607 = vmatpush.msra.mxu0 0.0
        %608 = vmatpush.msra.mxu0 0.0
        %609 = vmatpush.msra.mxu0 0.0
        %610 = vmatpush.msra.mxu0 0.0
        %611 = vmatpush.msra.mxu0 0.0
        %612 = vmatpush.msra.mxu0 0.0
        %613 = vmatpush.msra.mxu0 0.0
        %614 = vmatpush.msra.mxu0 0.0
        %615 = vmatpush.msra.mxu0 0.0
        %616 = vmatpush.msra.mxu0 0.0
        %617 = vmatpush.msra.mxu0 0.0
        %618 = vmatpush.msra.mxu0 0.0
        %619 = vmatpush.msra.mxu0 0.0
        %620 = vmatpush.msra.mxu0 0.0
        %621 = vmatpush.msra.mxu0 0.0
        %622 = vmatpush.msra.mxu0 %v602
        %623 = vmatmul.f32.gmra.mxu0 %v605
        %v624 = vpop.f32.mrf.mxu0
        %v625 = vadd.f32 0.0, %v624
        %626 = vdwg.mxu0
        %628 = vrot.lane.b32.xlu0 %v625, 16
        %v629 = vpop.permute.xlu0 %628
        %vm631 = vcmask 162944
        %632 = vst.msk [vmem:[#allocation3] sm:$0xff] %vm631, %v629
        %v633 = vld [vmem:[#allocation2] sm:$0xff]
        %635 = vrot.lane.b32.xlu0 %v633, 108
        %v636 = vpop.permute.xlu0 %635
        %637 = vrot.lane.b32.xlu0 %v633, 76
        %v638 = vpop.permute.xlu0 %637
        %v639 = vsel %vm272, %v636, 0
        %v641 = vsel %vm272, %v638, 0
        %643 = vmatpush.xpose.msra.mxu0 0.0
        %644 = vmatpush.xpose.msra.mxu0 0.0
        %645 = vmatpush.xpose.msra.mxu0 0.0
        %646 = vmatpush.xpose.msra.mxu0 0.0
        %647 = vmatpush.xpose.msra.mxu0 0.0
        %648 = vmatpush.xpose.msra.mxu0 0.0
        %649 = vmatpush.xpose.msra.mxu0 0.0
        %650 = vmatpush.xpose.msra.mxu0 0.0
        %651 = vmatpush.xpose.msra.mxu0 0.0
        %652 = vmatpush.xpose.msra.mxu0 0.0
        %653 = vmatpush.xpose.msra.mxu0 0.0
        %654 = vmatpush.xpose.msra.mxu0 0.0
        %655 = vmatpush.xpose.msra.mxu0 0.0
        %656 = vmatpush.xpose.msra.mxu0 0.0
        %657 = vmatpush.xpose.msra.mxu0 0.0
        %658 = vmatpush.xpose.msra.mxu0 %v641
        %659 = vmatmul.f32.gmra.mxu0 %v639
        %v660 = vpop.f32.mrf.mxu0
        %v661 = vadd.f32 0.0, %v660
        %662 = vdwg.mxu0
        %v663 = vmul.f32 %v661, 0.5
        %v664 = vsel %vm298, %v663, -inf
        %665 = vmax.xlane.f32.xlu0 %v664
        %v666 = vpop.xlane.xlu0 %665
        %v667 = vsub.f32 %v663, %v666
        %v668 = vmul.f32 %v667, 1.442695
        %v669 = vpow.pop %v668
        %v670 = vsel %vm298, %v669, 0.0
        %671 = vadd.xlane.f32.xlu0 %v670
        %v672 = vpop.xlane.xlu0 %671
        %v673 = vrcp.pop %v672
        %v674 = vmul.f32 %v669, %v673
        %675 = vrot.lane.b32.xlu0 %v633, 44
        %v676 = vpop.permute.xlu0 %675
        %v679 = vsel %vm298, %v674, 0
        %681 = vmatpush.msra.mxu0 0.0
        %682 = vmatpush.msra.mxu0 0.0
        %683 = vmatpush.msra.mxu0 0.0
        %684 = vmatpush.msra.mxu0 0.0
        %685 = vmatpush.msra.mxu0 0.0
        %686 = vmatpush.msra.mxu0 0.0
        %687 = vmatpush.msra.mxu0 0.0
        %688 = vmatpush.msra.mxu0 0.0
        %689 = vmatpush.msra.mxu0 0.0
        %690 = vmatpush.msra.mxu0 0.0
        %691 = vmatpush.msra.mxu0 0.0
        %692 = vmatpush.msra.mxu0 0.0
        %693 = vmatpush.msra.mxu0 0.0
        %694 = vmatpush.msra.mxu0 0.0
        %695 = vmatpush.msra.mxu0 0.0
        %696 = vmatpush.msra.mxu0 %v676
        %697 = vmatmul.f32.gmra.mxu0 %v679
        %v698 = vpop.f32.mrf.mxu0
        %v699 = vadd.f32 0.0, %v698
        %700 = vdwg.mxu0
        %702 = vrot.lane.b32.xlu0 %v699, 20
        %v703 = vpop.permute.xlu0 %702
        %vm705 = vcmask 195744
        %706 = vst.msk [vmem:[#allocation3] sm:$0xff] %vm705, %v703
        %v707 = vld [vmem:[#allocation2] sm:$0xff]
        %709 = vrot.lane.b32.xlu0 %v707, 104
        %v710 = vpop.permute.xlu0 %709
        %711 = vrot.lane.b32.xlu0 %v707, 72
        %v712 = vpop.permute.xlu0 %711
        %v713 = vsel %vm272, %v710, 0
        %v715 = vsel %vm272, %v712, 0
        %717 = vmatpush.xpose.msra.mxu0 0.0
        %718 = vmatpush.xpose.msra.mxu0 0.0
        %719 = vmatpush.xpose.msra.mxu0 0.0
        %720 = vmatpush.xpose.msra.mxu0 0.0
        %721 = vmatpush.xpose.msra.mxu0 0.0
        %722 = vmatpush.xpose.msra.mxu0 0.0
        %723 = vmatpush.xpose.msra.mxu0 0.0
        %724 = vmatpush.xpose.msra.mxu0 0.0
        %725 = vmatpush.xpose.msra.mxu0 0.0
        %726 = vmatpush.xpose.msra.mxu0 0.0
        %727 = vmatpush.xpose.msra.mxu0 0.0
        %728 = vmatpush.xpose.msra.mxu0 0.0
        %729 = vmatpush.xpose.msra.mxu0 0.0
        %730 = vmatpush.xpose.msra.mxu0 0.0
        %731 = vmatpush.xpose.msra.mxu0 0.0
        %732 = vmatpush.xpose.msra.mxu0 %v715
        %733 = vmatmul.f32.gmra.mxu0 %v713
        %v734 = vpop.f32.mrf.mxu0
        %v735 = vadd.f32 0.0, %v734
        %736 = vdwg.mxu0
        %v737 = vmul.f32 %v735, 0.5
        %v738 = vsel %vm298, %v737, -inf
        %739 = vmax.xlane.f32.xlu0 %v738
        %v740 = vpop.xlane.xlu0 %739
        %v741 = vsub.f32 %v737, %v740
        %v742 = vmul.f32 %v741, 1.442695
        %v743 = vpow.pop %v742
        %v744 = vsel %vm298, %v743, 0.0
        %745 = vadd.xlane.f32.xlu0 %v744
        %v746 = vpop.xlane.xlu0 %745
        %v747 = vrcp.pop %v746
        %v748 = vmul.f32 %v743, %v747
        %749 = vrot.lane.b32.xlu0 %v707, 40
        %v750 = vpop.permute.xlu0 %749
        %v753 = vsel %vm298, %v748, 0
        %755 = vmatpush.msra.mxu0 0.0
        %756 = vmatpush.msra.mxu0 0.0
        %757 = vmatpush.msra.mxu0 0.0
        %758 = vmatpush.msra.mxu0 0.0
        %759 = vmatpush.msra.mxu0 0.0
        %760 = vmatpush.msra.mxu0 0.0
        %761 = vmatpush.msra.mxu0 0.0
        %762 = vmatpush.msra.mxu0 0.0
        %763 = vmatpush.msra.mxu0 0.0
        %764 = vmatpush.msra.mxu0 0.0
        %765 = vmatpush.msra.mxu0 0.0
        %766 = vmatpush.msra.mxu0 0.0
        %767 = vmatpush.msra.mxu0 0.0
        %768 = vmatpush.msra.mxu0 0.0
        %769 = vmatpush.msra.mxu0 0.0
        %770 = vmatpush.msra.mxu0 %v750
        %771 = vmatmul.f32.gmra.mxu0 %v753
        %v772 = vpop.f32.mrf.mxu0
        %v773 = vadd.f32 0.0, %v772
        %774 = vdwg.mxu0
        %776 = vrot.lane.b32.xlu0 %v773, 24
        %v777 = vpop.permute.xlu0 %776
        %vm779 = vcmask 228544
        %780 = vst.msk [vmem:[#allocation3] sm:$0xff] %vm779, %v777
        %v781 = vld [vmem:[#allocation2] sm:$0xff]
        %783 = vrot.lane.b32.xlu0 %v781, 100
        %v784 = vpop.permute.xlu0 %783
        %785 = vrot.lane.b32.xlu0 %v781, 68
        %v786 = vpop.permute.xlu0 %785
        %v787 = vsel %vm272, %v784, 0
        %v789 = vsel %vm272, %v786, 0
        %791 = vmatpush.xpose.msra.mxu0 0.0
        %792 = vmatpush.xpose.msra.mxu0 0.0
        %793 = vmatpush.xpose.msra.mxu0 0.0
        %794 = vmatpush.xpose.msra.mxu0 0.0
        %795 = vmatpush.xpose.msra.mxu0 0.0
        %796 = vmatpush.xpose.msra.mxu0 0.0
        %797 = vmatpush.xpose.msra.mxu0 0.0
        %798 = vmatpush.xpose.msra.mxu0 0.0
        %799 = vmatpush.xpose.msra.mxu0 0.0
        %800 = vmatpush.xpose.msra.mxu0 0.0
        %801 = vmatpush.xpose.msra.mxu0 0.0
        %802 = vmatpush.xpose.msra.mxu0 0.0
        %803 = vmatpush.xpose.msra.mxu0 0.0
        %804 = vmatpush.xpose.msra.mxu0 0.0
        %805 = vmatpush.xpose.msra.mxu0 0.0
        %806 = vmatpush.xpose.msra.mxu0 %v789
        %807 = vmatmul.f32.gmra.mxu0 %v787
        %v808 = vpop.f32.mrf.mxu0
        %v809 = vadd.f32 0.0, %v808
        %810 = vdwg.mxu0
        %v811 = vmul.f32 %v809, 0.5
        %v812 = vsel %vm298, %v811, -inf
        %813 = vmax.xlane.f32.xlu0 %v812
        %v814 = vpop.xlane.xlu0 %813
        %v815 = vsub.f32 %v811, %v814
        %v816 = vmul.f32 %v815, 1.442695
        %v817 = vpow.pop %v816
        %v818 = vsel %vm298, %v817, 0.0
        %819 = vadd.xlane.f32.xlu0 %v818
        %v820 = vpop.xlane.xlu0 %819
        %v821 = vrcp.pop %v820
        %v822 = vmul.f32 %v817, %v821
        %823 = vrot.lane.b32.xlu0 %v781, 36
        %v824 = vpop.permute.xlu0 %823
        %v827 = vsel %vm298, %v822, 0
        %829 = vmatpush.msra.mxu0 0.0
        %830 = vmatpush.msra.mxu0 0.0
        %831 = vmatpush.msra.mxu0 0.0
        %832 = vmatpush.msra.mxu0 0.0
        %833 = vmatpush.msra.mxu0 0.0
        %834 = vmatpush.msra.mxu0 0.0
        %835 = vmatpush.msra.mxu0 0.0
        %836 = vmatpush.msra.mxu0 0.0
        %837 = vmatpush.msra.mxu0 0.0
        %838 = vmatpush.msra.mxu0 0.0
        %839 = vmatpush.msra.mxu0 0.0
        %840 = vmatpush.msra.mxu0 0.0
        %841 = vmatpush.msra.mxu0 0.0
        %842 = vmatpush.msra.mxu0 0.0
        %843 = vmatpush.msra.mxu0 0.0
        %844 = vmatpush.msra.mxu0 %v824
        %845 = vmatmul.f32.gmra.mxu0 %v827
        %v846 = vpop.f32.mrf.mxu0
        %v847 = vadd.f32 0.0, %v846
        %848 = vdwg.mxu0
        %850 = vrot.lane.b32.xlu0 %v847, 28
        %v851 = vpop.permute.xlu0 %850
        %vm853 = vcmask 261344
        %854 = vst.msk [vmem:[#allocation3] sm:$0xff] %vm853, %v851
        %v855 = vld [vmem:[#allocation3] sm:$0xff]
        %v856 = vld [vmem:[%s2] sm:$0xff]
        %v857 = vld [vmem:[%s2 + $0x8] sm:$0xff]
        %v858 = vld [vmem:[%s2 + $0x10] sm:$0xff]
        %v859 = vld [vmem:[%s2 + $0x18] sm:$0xff]
        %v860 = vld [vmem:[%s3] sm:$0x1]
        %v862 = vperm.slane %v860, 0
        %v865 = vsel %vm206, %v855, 0
        %v868 = vsel %vm206, %v856, 0
        %v871 = vsel %vm206, %v857, 0
        %v874 = vsel %vm206, %v858, 0
        %v877 = vsel %vm206, %v859, 0
        %879 = vmatpush.xpose.msra.mxu0 0.0
        %880 = vmatpush.xpose.msra.mxu0 0.0
        %881 = vmatpush.xpose.msra.mxu0 0.0
        %882 = vmatpush.xpose.msra.mxu0 0.0
        %883 = vmatpush.xpose.msra.mxu0 0.0
        %884 = vmatpush.xpose.msra.mxu0 0.0
        %885 = vmatpush.xpose.msra.mxu0 0.0
        %886 = vmatpush.xpose.msra.mxu0 0.0
        %887 = vmatpush.xpose.msra.mxu0 0.0
        %888 = vmatpush.xpose.msra.mxu0 0.0
        %889 = vmatpush.xpose.msra.mxu0 0.0
        %890 = vmatpush.xpose.msra.mxu0 0.0
        %891 = vmatpush.xpose.msra.mxu0 %v877
        %892 = vmatpush.xpose.msra.mxu0 %v874
        %893 = vmatpush.xpose.msra.mxu0 %v871
        %894 = vmatpush.xpose.msra.mxu0 %v868
        %895 = vmatmul.f32.gmra.mxu0 %v865
        %v896 = vpop.f32.mrf.mxu0
        %v897 = vadd.f32 %v862, %v896
        %898 = vdwg.mxu0
        %899 = vst.msk [vmem:[%s188] sm:$0xff] %vm206, %v897
        %s900 = sand.u32 %s115, 1
        %s901 = scalar_lea.sflag [#allocation5], %s900
        %s902 = sand.u32 %s115, 1
        %s903 = smul.addr %s902, 8
        %s904 = scalar_lea.vmem [#allocation4], %s903
        // Predicated region
        $region37: #{tpu_custom_call.1} parent=35 // pred_check
          %p905 = pneg %p125
        $region38: #{tpu_custom_call.1} parent=35 // pred_check_branch
          %907 = sbr.rel (%p905) target = $region40
        $region39: #{tpu_custom_call.1} parent=35 // pred_region
          %909 = vsyncadd %s901, 0
          %s910 = smul.addr %s18, 8
          %s911 = scalar_lea.hbm %s4, %s910
          %s913 = sshll.u32 %s904, 4
          %s914 = int_to_ptr.vmem [resolvable:$true] %s913
          %s915 = sshll.u32 %s911, 4
          %s916 = int_to_ptr.hbm [resolvable:$true] %s915
          %918 = dma.vmem_to_hbm [thread:$0]  %s914, 128, %s916, %s901
        $region40: #{tpu_custom_call.1} parent=35 // pred_fallthru
          _
      $region36: #{tpu_custom_call.1} parent=5 // pred_fallthru
        _
      %p919 = scmp.le.s32.totalorder 2, %s13
      // Predicated region
      $region41: #{tpu_custom_call.1} parent=5 // pred_check
        %p920 = pneg %p919
      $region42: #{tpu_custom_call.1} parent=5 // pred_check_branch
        %922 = sbr.rel (%p920) target = $region44
      $region43: #{tpu_custom_call.1} parent=5 // pred_region
        %s923 = ssub.s32 %s13, 2
        // Predicated region
        $region45: #{tpu_custom_call.1} parent=43 // pred_check
          %p924 = pneg %p131
        $region46: #{tpu_custom_call.1} parent=43 // pred_check_branch
          %926 = sbr.rel (%p924) target = $region48
        $region47: #{tpu_custom_call.1} parent=43 // pred_region
          %s927 = sand.u32 %s116, 1
          %s928 = scalar_lea.sflag [#allocation5], %s927
          %s929 = sand.u32 %s116, 1
          %s930 = smul.addr %s929, 8
          %s931 = scalar_lea.vmem [#allocation4], %s930
          %933 = dma.done %s928, 128
        $region48: #{tpu_custom_call.1} parent=43 // pred_fallthru
          _
      $region44: #{tpu_custom_call.1} parent=5 // pred_fallthru
        _
    $region6: #{tpu_custom_call.1} parent=1 // loop_footer
      %s17 = sadd.s32 1, %s13
    $region7: #{tpu_custom_call.1} parent=1 // loop_footer_branch
      %12 = sbr.rel target = $region3
    $region8: #{tpu_custom_call.1} parent=1 // loop_exit
      _
    %934 = vsyncpa [#allocation5], 1
    %s935 = scalar_lea.sflag [#allocation5], 1
    %936 = vsyncpa %s935, 1

</llo_original>
